<compile_context>
chip_gen: v5e
topology: v5e:2x2
jax: 0.10.0
libtpu: 0.0.40
codegen_flags: <defaults>
</compile_context>

<pallas_src>
import functools

import jax
import jax.numpy as jnp
from jax.experimental import pallas as pl
from jax.experimental.pallas import tpu as pltpu


def _layer_norm_kernel(x_ref, g_ref, b_ref, o_ref, *, eps, feat):
    # x_ref: (Bt, H), g_ref/b_ref: (1, H), o_ref: (Bt, H)
    x = x_ref[...].astype(jnp.float32)                       # (Bt, H)

    mean = jnp.mean(x, axis=-1, keepdims=True)               # (Bt, 1)
    xc = x - mean                                            # (Bt, H)

    # torch.std(..., unbiased=True): divide by (H - 1), not H.
    var = jnp.sum(xc * xc, axis=-1, keepdims=True) * (1.0 / (feat - 1))
    std = jnp.sqrt(var)                                      # (Bt, 1)
    inv = 1.0 / (std + eps)                                  # eps added to std

    out = g_ref[...] * (xc * inv) + b_ref[...]               # (Bt, H)
    o_ref[...] = out.astype(o_ref.dtype)


def _round_up(a, b):
    return ((a + b - 1) // b) * b


def layer_norm(x, a_2, b_2, eps=1e-6, max_block_rows=512):
    """Pallas LayerNorm over the last axis.

    x:   (..., H) float32
    a_2: (H,) scale, b_2: (H,) bias
    Returns an array of the same shape/dtype as x.
    """
    orig_shape = x.shape
    H = orig_shape[-1]
    assert a_2.shape == (H,) and b_2.shape == (H,)

    x2 = x.reshape(-1, H)
    N = x2.shape[0]

    # Row block: multiple of 8 (sublane tile), capped, and padding N so the
    # grid divides evenly.  Padded rows are zeros; their output is discarded.
    block_rows = min(max_block_rows, _round_up(N, 8))
    n_pad = _round_up(N, block_rows)
    if n_pad != N:
        x2 = jnp.pad(x2, ((0, n_pad - N), (0, 0)))

    gamma = a_2.reshape(1, H).astype(jnp.float32)
    beta = b_2.reshape(1, H).astype(jnp.float32)

    grid = (n_pad // block_rows,)

    out = pl.pallas_call(
        functools.partial(_layer_norm_kernel, eps=float(eps), feat=float(H)),
        out_shape=jax.ShapeDtypeStruct((n_pad, H), x.dtype),
        grid_spec=pltpu.PrefetchScalarGridSpec(
            num_scalar_prefetch=0,
            grid=grid,
            in_specs=[
                pl.BlockSpec((block_rows, H), lambda i: (i, 0)),
                pl.BlockSpec((1, H), lambda i: (0, 0)),   # gamma: VMEM-resident
                pl.BlockSpec((1, H), lambda i: (0, 0)),   # beta:  VMEM-resident
            ],
            out_specs=pl.BlockSpec((block_rows, H), lambda i: (i, 0)),
        ),
        compiler_params=pltpu.CompilerParams(
            dimension_semantics=("parallel",),
        ),
    )(x2, gamma, beta)

    return out[:N].reshape(orig_shape)


def _layer_norm_ref(x, a_2, b_2, eps=1e-6):
    """Pure-JAX reference, bit-matching the PyTorch module's math."""
    mean = jnp.mean(x, axis=-1, keepdims=True)
    var = jnp.sum((x - mean) ** 2, axis=-1, keepdims=True) / (x.shape[-1] - 1)
    std = jnp.sqrt(var)
    return a_2 * (x - mean) / (std + eps) + b_2


if __name__ == "__main__":
    # Small shapes consistent with the module: (batch, seq, features).
    # features chosen lane-dense (multiple of 128) per the perf review.
    B, S, H = 2, 8, 256
    eps = 1e-6

    key = jax.random.PRNGKey(0)
    k_x, k_g, k_b = jax.random.split(key, 3)

    x = jax.random.normal(k_x, (B, S, H), dtype=jnp.float32)
    # Module init is ones/zeros; use random learnable-like params so the
    # scale/shift path is actually exercised (deterministic via PRNGKey(0)).
    a_2 = 1.0 + 0.1 * jax.random.normal(k_g, (H,), dtype=jnp.float32)
    b_2 = 0.1 * jax.random.normal(k_b, (H,), dtype=jnp.float32)

    out = layer_norm(x, a_2, b_2, eps=eps)
    out = jax.block_until_ready(out)

    ref = _layer_norm_ref(x, a_2, b_2, eps=eps)
    assert out.shape == (B, S, H)
    assert jnp.allclose(out, ref, atol=1e-5, rtol=1e-5), "mismatch vs reference"

    print("KERNEL_OK")
</pallas_src>

<mosaic_0001>
module attributes {stable_mosaic.version = 11 : i64} {
  func.func @_layer_norm_kernel(%arg0: i32, %arg1: memref<16x256xf32, #tpu.memory_space<vmem>>, %arg2: memref<1x256xf32, #tpu.memory_space<vmem>>, %arg3: memref<1x256xf32, #tpu.memory_space<vmem>>, %arg4: memref<16x256xf32, #tpu.memory_space<vmem>>) attributes {dimension_semantics = [#tpu.dimension_semantics<parallel>], iteration_bounds = array<i64: 1>, scalar_prefetch = 0 : i64, scratch_operands = 0 : i64, tpu.core_type = #tpu.core_type<tc>, window_params = [{transform_indices = @transform_0, window_bounds = array<i64: 16, 256>}, {pipeline_mode = #tpu.pipeline_mode<synchronous>, transform_indices = @transform_1, window_bounds = array<i64: 1, 256>}, {pipeline_mode = #tpu.pipeline_mode<synchronous>, transform_indices = @transform_2, window_bounds = array<i64: 1, 256>}, {transform_indices = @transform_3, window_bounds = array<i64: 16, 256>}]} {
    %c0 = arith.constant 0 : index
    %c0_0 = arith.constant 0 : index
    %0 = vector.load %arg1[%c0, %c0_0] : memref<16x256xf32, #tpu.memory_space<vmem>>, vector<16x256xf32>
    %cst = arith.constant dense<0.000000e+00> : vector<16xf32>
    %1 = vector.multi_reduction <add>, %0, %cst [1] : vector<16x256xf32> to vector<16xf32>
    %2 = vector.shape_cast %1 : vector<16xf32> to vector<16x1xf32>
    %cst_1 = arith.constant 2.560000e+02 : f32
    %3 = vector.broadcast %cst_1 : f32 to vector<16x1xf32>
    %4 = arith.divf %2, %3 : vector<16x1xf32>
    %5 = vector.broadcast %4 : vector<16x1xf32> to vector<16x256xf32>
    %6 = arith.subf %0, %5 : vector<16x256xf32>
    %7 = arith.mulf %6, %6 : vector<16x256xf32>
    %cst_2 = arith.constant dense<0.000000e+00> : vector<16xf32>
    %8 = vector.multi_reduction <add>, %7, %cst_2 [1] : vector<16x256xf32> to vector<16xf32>
    %9 = vector.shape_cast %8 : vector<16xf32> to vector<16x1xf32>
    %cst_3 = arith.constant 0.00392156886 : f32
    %10 = vector.broadcast %cst_3 : f32 to vector<16x1xf32>
    %11 = arith.mulf %9, %10 : vector<16x1xf32>
    %12 = math.sqrt %11 : vector<16x1xf32>
    %cst_4 = arith.constant 9.99999997E-7 : f32
    %13 = vector.broadcast %cst_4 : f32 to vector<16x1xf32>
    %14 = arith.addf %12, %13 : vector<16x1xf32>
    %cst_5 = arith.constant 1.000000e+00 : f32
    %15 = vector.broadcast %cst_5 : f32 to vector<16x1xf32>
    %16 = arith.divf %15, %14 : vector<16x1xf32>
    %c0_6 = arith.constant 0 : index
    %c0_7 = arith.constant 0 : index
    %17 = vector.load %arg2[%c0_6, %c0_7] : memref<1x256xf32, #tpu.memory_space<vmem>>, vector<1x256xf32>
    %18 = vector.broadcast %16 : vector<16x1xf32> to vector<16x256xf32>
    %19 = arith.mulf %6, %18 : vector<16x256xf32>
    %20 = vector.broadcast %17 : vector<1x256xf32> to vector<16x256xf32>
    %21 = arith.mulf %20, %19 : vector<16x256xf32>
    %c0_8 = arith.constant 0 : index
    %c0_9 = arith.constant 0 : index
    %22 = vector.load %arg3[%c0_8, %c0_9] : memref<1x256xf32, #tpu.memory_space<vmem>>, vector<1x256xf32>
    %23 = vector.broadcast %22 : vector<1x256xf32> to vector<16x256xf32>
    %24 = arith.addf %21, %23 : vector<16x256xf32>
    %c0_10 = arith.constant 0 : index
    %c0_11 = arith.constant 0 : index
    %25 = vector.load %arg4[%c0_10, %c0_11] : memref<16x256xf32, #tpu.memory_space<vmem>>, vector<16x256xf32>
    tpu.vector_store %arg4[%c0_10, %c0_11], %24 {strides = array<i32>} : memref<16x256xf32, #tpu.memory_space<vmem>>, vector<16x256xf32>,
    return
  }
  func.func @transform_0(%arg0: i32) -> (i32, i32) {
    %c0_i32 = arith.constant 0 : i32
    %c0_i32_0 = arith.constant 0 : i32
    return %arg0, %c0_i32 : i32, i32
  }
  func.func @transform_1(%arg0: i32) -> (i32, i32) {
    %c0_i32 = arith.constant 0 : i32
    %c0_i32_0 = arith.constant 0 : i32
    %c0_i32_1 = arith.constant 0 : i32
    return %c0_i32, %c0_i32_0 : i32, i32
  }
  func.func @transform_2(%arg0: i32) -> (i32, i32) {
    %c0_i32 = arith.constant 0 : i32
    %c0_i32_0 = arith.constant 0 : i32
    %c0_i32_1 = arith.constant 0 : i32
    return %c0_i32, %c0_i32_0 : i32, i32
  }
  func.func @transform_3(%arg0: i32) -> (i32, i32) {
    %c0_i32 = arith.constant 0 : i32
    %c0_i32_0 = arith.constant 0 : i32
    return %arg0, %c0_i32 : i32, i32
  }
}

</mosaic_0001>

<llo_original>
// kernel: tpu_custom_call.1
$region0: #{tpu_custom_call.1}
  #allocation0 [shape = 'u32[]', space=smem, size = 0x4, offset = 0x4, fixed_abs, tag = 'smem constant byte address 0x4 - core index']
  #allocation1 [shape = 'u32[72,128]{1,0:T(1,128)}', space=vmem, size = 0x9000, scoped, tag = 'internal scratch']
  %s0 = inlined_call_operand.hbm [shape: f32[16,256], index: 0, kind: input, shape index: {}]
  %s1 = inlined_call_operand.hbm [shape: f32[1,256], index: 1, kind: input, shape index: {}]
  %s2 = inlined_call_operand.hbm [shape: f32[1,256], index: 2, kind: input, shape index: {}]
  %s3 = inlined_call_operand.hbm [shape: f32[16,256], index: 3, kind: output, shape index: {}]
  %s4 = sld [smem:[#allocation0]]
  $region34: #{tpu_custom_call.1} parent=0
    _
  %s6 = ssub.s32 1, %s4
  %s7 = scalar_select 0, %s6, %s4
  $region1: #{tpu_custom_call.1} parent=0
    #allocation2 [shape = 'u8[16384]{0}', space=vmem, size = 0x4000, scoped, tag = 'input window, operand 0, single buffered']
    #allocation3 [shape = 's32[1]{0}', space=sflag, size = 0x4, scoped, tag = 'scoped memory for tpu_custom_call.1']
    #allocation4 [shape = 's32[1]{0}', space=sflag, size = 0x4, scoped, tag = 'scoped memory for tpu_custom_call.1']
    #allocation5 [shape = 'u8[1024]{0}', space=vmem, size = 0x400, scoped, tag = 'input window, operand 1, single buffered']
    #allocation6 [shape = 's32[1]{0}', space=sflag, size = 0x4, scoped, tag = 'scoped memory for tpu_custom_call.1']
    #allocation7 [shape = 'u8[1024]{0}', space=vmem, size = 0x400, scoped, tag = 'input window, operand 2, single buffered']
    #allocation8 [shape = 'u8[16384]{0}', space=vmem, size = 0x4000, scoped, tag = 'output window, operand 0, single buffered']
    %8 = vsyncpa [#allocation3], 0
    %9 = vsyncpa [#allocation6], 0
    %10 = vsyncpa [#allocation4], 0
    // Predicated region
    $region2: #{tpu_custom_call.1} parent=1 // pred_check
      _
    $region3: #{tpu_custom_call.1} parent=1 // pred_check_branch
      %12 = sbr.rel (0) target = $region5
    $region4: #{tpu_custom_call.1} parent=1 // pred_region
      %14 = vsyncadd [#allocation3], 0
      %s15 = sshll.u32 %s0, 4
      %s16 = int_to_ptr.hbm [resolvable:$true] %s15
      %s17 = sshll.u32 [#allocation2], 4
      %s18 = int_to_ptr.vmem [resolvable:$true] %s17
      %23 = dma.hbm_to_vmem [thread:$0]  %s16, 512, %s18, [#allocation3], 256, 256, 16
    $region5: #{tpu_custom_call.1} parent=1 // pred_fallthru
      _
    // Predicated region
    $region6: #{tpu_custom_call.1} parent=1 // pred_check
      _
    $region7: #{tpu_custom_call.1} parent=1 // pred_check_branch
      %25 = sbr.rel (0) target = $region9
    $region8: #{tpu_custom_call.1} parent=1 // pred_region
      %27 = vsyncadd [#allocation6], 0
      %s29 = sshll.u32 %s1, 4
      %s30 = int_to_ptr.hbm [resolvable:$true] %s29
      %s31 = sshll.u32 [#allocation5], 4
      %s32 = int_to_ptr.vmem [resolvable:$true] %s31
      %34 = dma.hbm_to_vmem [thread:$0]  %s30, 32, %s32, [#allocation6]
    $region9: #{tpu_custom_call.1} parent=1 // pred_fallthru
      _
    // Predicated region
    $region10: #{tpu_custom_call.1} parent=1 // pred_check
      _
    $region11: #{tpu_custom_call.1} parent=1 // pred_check_branch
      %36 = sbr.rel (0) target = $region13
    $region12: #{tpu_custom_call.1} parent=1 // pred_region
      %38 = vsyncadd [#allocation6], 0
      %s40 = sshll.u32 %s2, 4
      %s41 = int_to_ptr.hbm [resolvable:$true] %s40
      %s42 = sshll.u32 [#allocation7], 4
      %s43 = int_to_ptr.vmem [resolvable:$true] %s42
      %45 = dma.hbm_to_vmem [thread:$0]  %s41, 32, %s43, [#allocation6]
    $region13: #{tpu_custom_call.1} parent=1 // pred_fallthru
      _
    // Predicated region
    $region14: #{tpu_custom_call.1} parent=1 // pred_check
      _
    $region15: #{tpu_custom_call.1} parent=1 // pred_check_branch
      %47 = sbr.rel (0) target = $region17
    $region16: #{tpu_custom_call.1} parent=1 // pred_region
      %49 = dma.done [#allocation3], 512
    $region17: #{tpu_custom_call.1} parent=1 // pred_fallthru
      _
    // Predicated region
    $region18: #{tpu_custom_call.1} parent=1 // pred_check
      _
    $region19: #{tpu_custom_call.1} parent=1 // pred_check_branch
      %51 = sbr.rel (0) target = $region21
    $region20: #{tpu_custom_call.1} parent=1 // pred_region
      %53 = dma.done [#allocation6], 32
    $region21: #{tpu_custom_call.1} parent=1 // pred_fallthru
      _
    // Predicated region
    $region22: #{tpu_custom_call.1} parent=1 // pred_check
      _
    $region23: #{tpu_custom_call.1} parent=1 // pred_check_branch
      %55 = sbr.rel (0) target = $region25
    $region24: #{tpu_custom_call.1} parent=1 // pred_region
      %57 = dma.done [#allocation6], 32
    $region25: #{tpu_custom_call.1} parent=1 // pred_fallthru
      _
    %v58 = vld [vmem:[#allocation2] sm:$0xff]
    %v59 = vld [vmem:[#allocation2 + $0x8] sm:$0xff]
    %v60 = vld [vmem:[#allocation2 + $0x10] sm:$0xff]
    %v61 = vld [vmem:[#allocation2 + $0x18] sm:$0xff]
    %v62 = vadd.f32 %v58, %v59
    %63 = vadd.xlane.f32.xlu0 %v62
    %v64 = vpop.xlane.xlu0 %63
    %v65 = vadd.f32 %v60, %v61
    %66 = vadd.xlane.f32.xlu0 %v65
    %v67 = vpop.xlane.xlu0 %66
    %v68 = vrcp.pop 256.0
    %v69 = vmul.f32 256.0, %v68
    %v70 = vsub.f32 1.0, %v69
    %v71 = vmul.f32 %v68, %v70
    %v72 = vadd.f32 %v68, %v71
    %vm73 = vweird.f32 %v68
    %v74 = vsel %vm73, %v68, %v72
    %v75 = vmul.f32 %v64, %v74
    %v76 = vmul.f32 %v67, %v74
    %v77 = vsub.f32 %v58, %v75
    %v78 = vsub.f32 %v59, %v75
    %v79 = vsub.f32 %v60, %v76
    %v80 = vsub.f32 %v61, %v76
    %v81 = vmul.f32 %v77, %v77
    %v82 = vmul.f32 %v78, %v78
    %v83 = vmul.f32 %v79, %v79
    %v84 = vmul.f32 %v80, %v80
    %v85 = vadd.f32 %v81, %v82
    %86 = vadd.xlane.f32.xlu0 %v85
    %v87 = vpop.xlane.xlu0 %86
    %v88 = vadd.f32 %v83, %v84
    %89 = vadd.xlane.f32.xlu0 %v88
    %v90 = vpop.xlane.xlu0 %89
    %v91 = vmul.f32 %v87, 0.003921569
    %v92 = vmul.f32 %v90, 0.003921569
    %v93 = vrsqrt.pop %v91
    %v94 = vmul.f32 %v93, %v91
    %v95 = vmul.f32 %v94, %v93
    %v96 = vmul.f32 0.5, %v95
    %v97 = vsub.f32 1.5, %v96
    %v98 = vmul.f32 %v93, %v97
    %v99 = vmul.f32 %v91, %v98
    %vm100 = vcmp.eq.f32.partialorder %v91, inf
    %v101 = vsel %vm100, %v91, %v99
    %vm102 = vcmp.eq.f32.partialorder %v91, 0.0
    %v103 = vand.u32 %v91, 2147483648
    %v104 = vsel %vm102, %v103, %v101
    %v105 = vrsqrt.pop %v92
    %v106 = vmul.f32 %v105, %v92
    %v107 = vmul.f32 %v106, %v105
    %v108 = vmul.f32 0.5, %v107
    %v109 = vsub.f32 1.5, %v108
    %v110 = vmul.f32 %v105, %v109
    %v111 = vmul.f32 %v92, %v110
    %vm112 = vcmp.eq.f32.partialorder %v92, inf
    %v113 = vsel %vm112, %v92, %v111
    %vm114 = vcmp.eq.f32.partialorder %v92, 0.0
    %v115 = vand.u32 %v92, 2147483648
    %v116 = vsel %vm114, %v115, %v113
    %v117 = vadd.f32 %v104, 1e-06
    %v118 = vadd.f32 %v116, 1e-06
    %v119 = vrcp.pop %v117
    %v120 = vmul.f32 %v117, %v119
    %v121 = vsub.f32 1.0, %v120
    %v122 = vmul.f32 %v119, %v121
    %v123 = vadd.f32 %v119, %v122
    %vm124 = vweird.f32 %v117
    %vm125 = vweird.f32 %v119
    %vm126 = vmor %vm124, %vm125
    %v127 = vsel %vm126, %v119, %v123
    %v128 = vand.u32 2147483647, %v117
    %vm129 = vcmp.eq.f32.partialorder %v128, 8.507059e+37
    %v130 = vand.u32 %v117, 2147483648
    %v131 = vor.u32 1.1754944e-38, %v130
    %v132 = vsel %vm129, %v131, %v127
    %v133 = vmul.f32 1.0, %v132
    %v134 = vrcp.pop %v118
    %v135 = vmul.f32 %v118, %v134
    %v136 = vsub.f32 1.0, %v135
    %v137 = vmul.f32 %v134, %v136
    %v138 = vadd.f32 %v134, %v137
    %vm139 = vweird.f32 %v118
    %vm140 = vweird.f32 %v134
    %vm141 = vmor %vm139, %vm140
    %v142 = vsel %vm141, %v134, %v138
    %v143 = vand.u32 2147483647, %v118
    %vm144 = vcmp.eq.f32.partialorder %v143, 8.507059e+37
    %v145 = vand.u32 %v118, 2147483648
    %v146 = vor.u32 1.1754944e-38, %v145
    %v147 = vsel %vm144, %v146, %v142
    %v148 = vmul.f32 1.0, %v147
    %v149 = vld [vmem:[#allocation5] sm:$0x3]
    %v150 = vmul.f32 %v77, %v133
    %v151 = vmul.f32 %v78, %v133
    %v152 = vmul.f32 %v79, %v148
    %v153 = vmul.f32 %v80, %v148
    %v155 = vperm.slane %v149, 0
    %v156 = vperm.slane %v149, 1
    %v159 = vmul.f32 %v155, %v150
    %v160 = vmul.f32 %v156, %v151
    %v161 = vmul.f32 %v155, %v152
    %v162 = vmul.f32 %v156, %v153
    %v163 = vld [vmem:[#allocation7] sm:$0x3]
    %v165 = vperm.slane %v163, 0
    %v166 = vperm.slane %v163, 1
    %v169 = vadd.f32 %v159, %v165
    %v170 = vadd.f32 %v160, %v166
    %v171 = vadd.f32 %v161, %v165
    %v172 = vadd.f32 %v162, %v166
    %173 = vst [vmem:[#allocation8] sm:$0xff] %v169
    %174 = vst [vmem:[#allocation8 + $0x8] sm:$0xff] %v170
    %175 = vst [vmem:[#allocation8 + $0x10] sm:$0xff] %v171
    %176 = vst [vmem:[#allocation8 + $0x18] sm:$0xff] %v172
    // Predicated region
    $region26: #{tpu_custom_call.1} parent=1 // pred_check
      _
    $region27: #{tpu_custom_call.1} parent=1 // pred_check_branch
      %178 = sbr.rel (0) target = $region29
    $region28: #{tpu_custom_call.1} parent=1 // pred_region
      %180 = vsyncadd [#allocation4], 0
      %s181 = sshll.u32 [#allocation8], 4
      %s182 = int_to_ptr.vmem [resolvable:$true] %s181
      %s183 = sshll.u32 %s3, 4
      %s184 = int_to_ptr.hbm [resolvable:$true] %s183
      %189 = dma.vmem_to_hbm [thread:$0]  %s182, 512, %s184, [#allocation4], 256, 256, 16
    $region29: #{tpu_custom_call.1} parent=1 // pred_fallthru
      _
    // Predicated region
    $region30: #{tpu_custom_call.1} parent=1 // pred_check
      _
    $region31: #{tpu_custom_call.1} parent=1 // pred_check_branch
      %191 = sbr.rel (0) target = $region33
    $region32: #{tpu_custom_call.1} parent=1 // pred_region
      %193 = dma.done [#allocation4], 512
    $region33: #{tpu_custom_call.1} parent=1 // pred_fallthru
      _
    %194 = vsyncpa [#allocation3], 1
    %195 = vsyncpa [#allocation6], 1
    %196 = vsyncpa [#allocation4], 1

</llo_original>
